<compile_context>
chip_gen: v5e
topology: v5e:2x2
jax: 0.10.0
libtpu: 0.0.40
codegen_flags: <defaults>
</compile_context>

<pallas_src>
import functools

import jax
import jax.numpy as jnp
from jax.experimental import pallas as pl
from jax.experimental.pallas import tpu as pltpu

_LANES = 128
_SUBLANES = 8


def _round_up(a, b):
    return ((a + b - 1) // b) * b


def _detect_num_tensorcores():
    """2 on chips whose Pallas 'parallel' axis spans two TensorCores, else 1."""
    try:
        kind = (getattr(jax.devices()[0], "device_kind", "") or "").lower()
    except Exception:
        return 1
    if "v7" in kind or "v4" in kind:   # v7x (2 TC/chip) and v4 megacore
        return 2
    return 1                           # v5e / v6e / others: single TensorCore


def _charbonnier_kernel(x_ref, y_ref, o_ref, *, eps, block_rows,
                        tiles_per_core, n_rows):
    c = pl.program_id(0)   # TensorCore partial-sum slot ("parallel")
    t = pl.program_id(1)   # tile within this core's range ("arbitrary")

    @pl.when(t == 0)
    def _():
        o_ref[...] = jnp.zeros_like(o_ref)

    d = x_ref[...].astype(jnp.float32) - y_ref[...].astype(jnp.float32)
    term = jnp.sqrt(d * d + jnp.float32(eps * eps))

    tile = c * tiles_per_core + t          # UNclamped tile id
    tile_start = tile * block_rows
    is_full = tile_start + block_rows <= n_rows   # every row of this tile valid?

    @pl.when(is_full)
    def _():
        # Interior tiles: pure VPU reduce, no iota/mask work at all.
        partial = term.reshape(block_rows // _SUBLANES, _SUBLANES, _LANES).sum(axis=0)
        o_ref[...] += partial[None]

    @pl.when(jnp.logical_not(is_full))
    def _():
        # Only the ragged last tile and clamped-duplicate tiles pay for the
        # mask. Keep jnp.where (a select): the OOB region of a partial block's
        # VMEM buffer is unspecified and may hold NaN/Inf.
        row = jax.lax.broadcasted_iota(jnp.int32, (block_rows, _LANES), 0) + tile_start
        masked = jnp.where(row < n_rows, term, jnp.float32(0.0))
        partial = masked.reshape(block_rows // _SUBLANES, _SUBLANES, _LANES).sum(axis=0)
        o_ref[...] += partial[None]


def charbonnier_loss(x, y, eps=1e-3, target_tile_bytes=4 << 20, num_cores=None):
    """mean(sqrt((x-y)^2 + eps^2)) via a streaming Pallas reduction kernel.

    NOTE: `eps` is baked in at trace time (must be a Python float).
    """
    assert x.shape == y.shape
    n_true = int(x.size)
    assert n_true > 0
    eps = float(eps)
    eps2 = jnp.float32(eps * eps)

    # Flatten in native dtype (reshape of contiguous data -> no HBM copy).
    xf = jnp.ravel(x)
    yf = jnp.ravel(y)

    # Kernel covers the largest 128-lane-aligned prefix; the ragged tail
    # (< 128 elements) is handled in plain JAX below instead of padding and
    # copying both full arrays.
    n_rows = n_true // _LANES
    n_main = n_rows * _LANES
    tail = n_true - n_main

    if n_rows == 0:
        # Tiny input (< one lane row): pure JAX, identical semantics.
        d = xf.astype(jnp.float32) - yf.astype(jnp.float32)
        return jnp.sum(jnp.sqrt(d * d + eps2)) / jnp.float32(n_true)

    x2 = xf[:n_main].reshape(n_rows, _LANES)
    y2 = yf[:n_main].reshape(n_rows, _LANES)

    # Sublane multiple required by the narrowest input dtype (f32:8, bf16:16, 8-bit:32).
    min_itemsize = min(x2.dtype.itemsize, y2.dtype.itemsize)
    sub_mult = {4: 8, 2: 16, 1: 32}.get(int(min_itemsize), 32)

    # Size tiles from a byte budget (~4 MiB per input tile) rather than a fixed
    # row count, so bf16/int8 inputs get tiles big enough to amortize the
    # per-grid-step overhead while staying inside v7x's 64 MiB VMEM.
    max_itemsize = max(x2.dtype.itemsize, y2.dtype.itemsize)
    block_rows = max(int(target_tile_bytes) // (_LANES * int(max_itemsize)), sub_mult)
    block_rows = _round_up(block_rows, sub_mult)
    block_rows = min(block_rows, _round_up(n_rows, sub_mult))  # don't over-tile tiny inputs

    n_tiles = (n_rows + block_rows - 1) // block_rows

    # 2-way split only where it buys parallelism (v7x / v4 megacore), and never
    # wider than the number of tiles -- single-TC v5e/v6e and tiny inputs get a
    # plain sequential grid with zero duplicate HBM reads.
    if num_cores is None:
        num_cores = _detect_num_tensorcores()
    num_cores = max(1, min(int(num_cores), n_tiles))
    tiles_per_core = (n_tiles + num_cores - 1) // num_cores

    def in_map(c, t):
        # Clamp so the DMA never walks past the array; clamped duplicates are
        # zeroed by the in-kernel mask (which uses the unclamped tile id).
        return (jnp.minimum(c * tiles_per_core + t, n_tiles - 1), 0)

    kernel = functools.partial(
        _charbonnier_kernel,
        eps=eps,
        block_rows=block_rows,
        tiles_per_core=tiles_per_core,
        n_rows=n_rows,
    )

    # Double-buffered input footprint + headroom; cap at 48 MiB so we never ask
    # for v7x's entire 64 MiB per-TC VMEM.
    tile_bytes = block_rows * _LANES * (x2.dtype.itemsize + y2.dtype.itemsize)
    vmem_limit = int(min(max(2 * tile_bytes + (8 << 20), 16 << 20), 48 << 20))

    cost = pl.CostEstimate(
        flops=5 * n_main,
        transcendentals=n_main,
        bytes_accessed=n_main * (x2.dtype.itemsize + y2.dtype.itemsize)
        + num_cores * _SUBLANES * _LANES * 4,
    )

    partials = pl.pallas_call(
        kernel,
        out_shape=jax.ShapeDtypeStruct((num_cores, _SUBLANES, _LANES), jnp.float32),
        grid_spec=pltpu.PrefetchScalarGridSpec(
            num_scalar_prefetch=0,
            grid=(num_cores, tiles_per_core),
            in_specs=[
                pl.BlockSpec((block_rows, _LANES), in_map),
                pl.BlockSpec((block_rows, _LANES), in_map),
            ],
            out_specs=pl.BlockSpec((1, _SUBLANES, _LANES), lambda c, t: (c, 0, 0)),
        ),
        compiler_params=pltpu.CompilerParams(
            dimension_semantics=("parallel", "arbitrary"),
            vmem_limit_bytes=vmem_limit,
        ),
        cost_estimate=cost,
    )(x2, y2)

    total = jnp.sum(partials)
    if tail:
        dt = xf[n_main:].astype(jnp.float32) - yf[n_main:].astype(jnp.float32)
        total = total + jnp.sum(jnp.sqrt(dt * dt + eps2))
    # Single cross-lane reduce + normalize, done once outside the hot loop.
    return total / jnp.float32(n_true)


if __name__ == "__main__":
    key = jax.random.PRNGKey(0)
    kx, ky = jax.random.split(key)
    # NCHW, like the PyTorch module's usual inputs.
    x = jax.random.normal(kx, (2, 4, 16, 16), dtype=jnp.float32)
    y = jax.random.normal(ky, (2, 4, 16, 16), dtype=jnp.float32)

    eps = 1e-3
    loss = charbonnier_loss(x, y, eps=eps)
    loss = jax.block_until_ready(loss)

    # pure-JAX reference check
    d = x - y
    ref = jnp.mean(jnp.sqrt(d * d + eps * eps))
    assert jnp.allclose(loss, ref, rtol=1e-5, atol=1e-6), (loss, ref)

    print("KERNEL_OK")
</pallas_src>

<mosaic_0001>
module attributes {stable_mosaic.version = 11 : i64} {
  func.func @_charbonnier_kernel(%arg0: i32, %arg1: i32, %arg2: memref<16x128xf32, #tpu.memory_space<vmem>>, %arg3: memref<16x128xf32, #tpu.memory_space<vmem>>, %arg4: memref<1x8x128xf32, #tpu.memory_space<vmem>>) attributes {dimension_semantics = [#tpu.dimension_semantics<parallel>, #tpu.dimension_semantics<arbitrary>], iteration_bounds = array<i64: 1, 1>, scalar_prefetch = 0 : i64, scratch_operands = 0 : i64, tpu.core_type = #tpu.core_type<tc>, window_params = [{transform_indices = @transform_0, window_bounds = array<i64: 16, 128>}, {transform_indices = @transform_1, window_bounds = array<i64: 16, 128>}, {transform_indices = @transform_2, window_bounds = array<i64: 1, 8, 128>}]} {
    %c0_i32 = arith.constant 0 : i32
    %0 = arith.cmpi eq, %arg1, %c0_i32 : i32
    %1 = arith.extui %0 : i1 to i32
    %c0_i32_0 = arith.constant 0 : i32
    %2 = arith.cmpi ne, %1, %c0_i32_0 : i32
    scf.if %2 {
      %cst_8 = arith.constant 0.000000e+00 : f32
      %20 = vector.broadcast %cst_8 : f32 to vector<1x8x128xf32>
      %c0_9 = arith.constant 0 : index
      %c0_10 = arith.constant 0 : index
      %c0_11 = arith.constant 0 : index
      %21 = vector.load %arg4[%c0_9, %c0_10, %c0_11] : memref<1x8x128xf32, #tpu.memory_space<vmem>>, vector<1x8x128xf32>
      tpu.vector_store %arg4[%c0_9, %c0_10, %c0_11], %20 {strides = array<i32>} : memref<1x8x128xf32, #tpu.memory_space<vmem>>, vector<1x8x128xf32>,
    } else {
    }
    %c0 = arith.constant 0 : index
    %c0_1 = arith.constant 0 : index
    %3 = vector.load %arg2[%c0, %c0_1] : memref<16x128xf32, #tpu.memory_space<vmem>>, vector<16x128xf32>
    %c0_2 = arith.constant 0 : index
    %c0_3 = arith.constant 0 : index
    %4 = vector.load %arg3[%c0_2, %c0_3] : memref<16x128xf32, #tpu.memory_space<vmem>>, vector<16x128xf32>
    %5 = arith.subf %3, %4 : vector<16x128xf32>
    %6 = arith.mulf %5, %5 : vector<16x128xf32>
    %cst = arith.constant 9.99999997E-7 : f32
    %7 = vector.broadcast %cst : f32 to vector<16x128xf32>
    %8 = arith.addf %6, %7 : vector<16x128xf32>
    %9 = math.sqrt %8 : vector<16x128xf32>
    %c1_i32 = arith.constant 1 : i32
    %10 = arith.muli %arg0, %c1_i32 : i32
    %11 = arith.addi %10, %arg1 : i32
    %c16_i32 = arith.constant 16 : i32
    %12 = arith.muli %11, %c16_i32 : i32
    %c16_i32_4 = arith.constant 16 : i32
    %13 = arith.addi %12, %c16_i32_4 : i32
    %c16_i32_5 = arith.constant 16 : i32
    %14 = arith.cmpi sle, %13, %c16_i32_5 : i32
    %15 = arith.extui %14 : i1 to i32
    %c0_i32_6 = arith.constant 0 : i32
    %16 = arith.cmpi ne, %15, %c0_i32_6 : i32
    scf.if %16 {
      %20 = vector.shape_cast %9 : vector<16x128xf32> to vector<2x8x128xf32>
      %cst_8 = arith.constant dense<0.000000e+00> : vector<8x128xf32>
      %21 = vector.multi_reduction <add>, %20, %cst_8 [0] : vector<2x8x128xf32> to vector<8x128xf32>
      %c0_9 = arith.constant 0 : index
      %c0_10 = arith.constant 0 : index
      %c0_11 = arith.constant 0 : index
      %22 = vector.load %arg4[%c0_9, %c0_10, %c0_11] : memref<1x8x128xf32, #tpu.memory_space<vmem>>, vector<1x8x128xf32>
      %23 = vector.shape_cast %21 : vector<8x128xf32> to vector<1x8x128xf32>
      %24 = arith.addf %22, %23 : vector<1x8x128xf32>
      %c0_12 = arith.constant 0 : index
      %c0_13 = arith.constant 0 : index
      %c0_14 = arith.constant 0 : index
      %25 = vector.load %arg4[%c0_12, %c0_13, %c0_14] : memref<1x8x128xf32, #tpu.memory_space<vmem>>, vector<1x8x128xf32>
      tpu.vector_store %arg4[%c0_12, %c0_13, %c0_14], %24 {strides = array<i32>} : memref<1x8x128xf32, #tpu.memory_space<vmem>>, vector<1x8x128xf32>,
    } else {
    }
    %true = arith.constant true
    %17 = arith.xori %14, %true : i1
    %18 = arith.extui %17 : i1 to i32
    %c0_i32_7 = arith.constant 0 : i32
    %19 = arith.cmpi ne, %18, %c0_i32_7 : i32
    scf.if %19 {
      %20 = tpu.iota {dimensions = array<i32: 0>} : vector<16x128xi32>
      %21 = vector.broadcast %12 : i32 to vector<16x128xi32>
      %22 = arith.addi %20, %21 : vector<16x128xi32>
      %c16_i32_8 = arith.constant 16 : i32
      %23 = vector.broadcast %c16_i32_8 : i32 to vector<16x128xi32>
      %24 = arith.cmpi slt, %22, %23 : vector<16x128xi32>
      %cst_9 = arith.constant 0.000000e+00 : f32
      %25 = vector.broadcast %cst_9 : f32 to vector<16x128xf32>
      %26 = arith.select %24, %9, %25 : vector<16x128xi1>, vector<16x128xf32>
      %27 = vector.shape_cast %26 : vector<16x128xf32> to vector<2x8x128xf32>
      %cst_10 = arith.constant dense<0.000000e+00> : vector<8x128xf32>
      %28 = vector.multi_reduction <add>, %27, %cst_10 [0] : vector<2x8x128xf32> to vector<8x128xf32>
      %c0_11 = arith.constant 0 : index
      %c0_12 = arith.constant 0 : index
      %c0_13 = arith.constant 0 : index
      %29 = vector.load %arg4[%c0_11, %c0_12, %c0_13] : memref<1x8x128xf32, #tpu.memory_space<vmem>>, vector<1x8x128xf32>
      %30 = vector.shape_cast %28 : vector<8x128xf32> to vector<1x8x128xf32>
      %31 = arith.addf %29, %30 : vector<1x8x128xf32>
      %c0_14 = arith.constant 0 : index
      %c0_15 = arith.constant 0 : index
      %c0_16 = arith.constant 0 : index
      %32 = vector.load %arg4[%c0_14, %c0_15, %c0_16] : memref<1x8x128xf32, #tpu.memory_space<vmem>>, vector<1x8x128xf32>
      tpu.vector_store %arg4[%c0_14, %c0_15, %c0_16], %31 {strides = array<i32>} : memref<1x8x128xf32, #tpu.memory_space<vmem>>, vector<1x8x128xf32>,
    } else {
    }
    return
  }
  func.func @transform_0(%arg0: i32, %arg1: i32) -> (i32, i32) {
    %c1_i32 = arith.constant 1 : i32
    %0 = arith.muli %arg0, %c1_i32 : i32
    %1 = arith.addi %0, %arg1 : i32
    %c0_i32 = arith.constant 0 : i32
    %2 = arith.minsi %1, %c0_i32 : i32
    %c0_i32_0 = arith.constant 0 : i32
    %c0_i32_1 = arith.constant 0 : i32
    return %2, %c0_i32_0 : i32, i32
  }
  func.func @transform_1(%arg0: i32, %arg1: i32) -> (i32, i32) {
    %c1_i32 = arith.constant 1 : i32
    %0 = arith.muli %arg0, %c1_i32 : i32
    %1 = arith.addi %0, %arg1 : i32
    %c0_i32 = arith.constant 0 : i32
    %2 = arith.minsi %1, %c0_i32 : i32
    %c0_i32_0 = arith.constant 0 : i32
    %c0_i32_1 = arith.constant 0 : i32
    return %2, %c0_i32_0 : i32, i32
  }
  func.func @transform_2(%arg0: i32, %arg1: i32) -> (i32, i32, i32) {
    %c0_i32 = arith.constant 0 : i32
    %c0_i32_0 = arith.constant 0 : i32
    %c0_i32_1 = arith.constant 0 : i32
    return %arg0, %c0_i32, %c0_i32_0 : i32, i32, i32
  }
}

</mosaic_0001>

<llo_original>
// kernel: tpu_custom_call.1
$region0: #{tpu_custom_call.1}
  #allocation0 [shape = 'u32[]', space=smem, size = 0x4, offset = 0x4, fixed_abs, tag = 'smem constant byte address 0x4 - core index']
  #allocation1 [shape = 'u32[72,128]{1,0:T(1,128)}', space=vmem, size = 0x9000, scoped, tag = 'internal scratch']
  %s0 = inlined_call_operand.hbm [shape: f32[16,128], index: 0, kind: input, shape index: {}]
  %s1 = inlined_call_operand.hbm [shape: f32[16,128], index: 1, kind: input, shape index: {}]
  %s2 = inlined_call_operand.hbm [shape: f32[1,8,128], index: 2, kind: output, shape index: {}]
  %s3 = sld [smem:[#allocation0]]
  $region38: #{tpu_custom_call.1} parent=0
    _
  %s5 = ssub.s32 1, %s3
  %s6 = scalar_select 0, %s5, %s3
  $region1: #{tpu_custom_call.1} parent=0
    #allocation2 [shape = 'u8[8192]{0}', space=vmem, size = 0x2000, scoped, tag = 'input window, operand 0, single buffered']
    #allocation3 [shape = 's32[1]{0}', space=sflag, size = 0x4, scoped, tag = 'scoped memory for tpu_custom_call.1']
    #allocation4 [shape = 's32[1]{0}', space=sflag, size = 0x4, scoped, tag = 'scoped memory for tpu_custom_call.1']
    #allocation5 [shape = 'u8[8192]{0}', space=vmem, size = 0x2000, scoped, tag = 'input window, operand 1, single buffered']
    #allocation6 [shape = 's32[1]{0}', space=sflag, size = 0x4, scoped, tag = 'scoped memory for tpu_custom_call.1']
    #allocation7 [shape = 'u8[4096]{0}', space=vmem, size = 0x1000, scoped, tag = 'output window, operand 0, single buffered']
    %7 = vsyncpa [#allocation3], 0
    %8 = vsyncpa [#allocation6], 0
    %9 = vsyncpa [#allocation4], 0
    // Predicated region
    $region2: #{tpu_custom_call.1} parent=1 // pred_check
      _
    $region3: #{tpu_custom_call.1} parent=1 // pred_check_branch
      %11 = sbr.rel (0) target = $region5
    $region4: #{tpu_custom_call.1} parent=1 // pred_region
      %s12 = sadd.s32 0, 0
      %p13 = scmp.lt.s32.totalorder %s12, 0
      %s14 = scalar_select %p13, %s12, 0
      %s15 = smul.u32 2, %s14
      %17 = vsyncadd [#allocation3], 0
      %s18 = smul.addr %s15, 8
      %s19 = scalar_lea.hbm %s0, %s18
      %s20 = sshll.u32 %s19, 4
      %s21 = int_to_ptr.hbm [resolvable:$true] %s20
      %s22 = sshll.u32 [#allocation2], 4
      %s23 = int_to_ptr.vmem [resolvable:$true] %s22
      %28 = dma.hbm_to_vmem [thread:$0]  %s21, 256, %s23, [#allocation3], 128, 128, 8
    $region5: #{tpu_custom_call.1} parent=1 // pred_fallthru
      _
    // Predicated region
    $region6: #{tpu_custom_call.1} parent=1 // pred_check
      _
    $region7: #{tpu_custom_call.1} parent=1 // pred_check_branch
      %30 = sbr.rel (0) target = $region9
    $region8: #{tpu_custom_call.1} parent=1 // pred_region
      %s31 = sadd.s32 0, 0
      %p32 = scmp.lt.s32.totalorder %s31, 0
      %s33 = scalar_select %p32, %s31, 0
      %s34 = smul.u32 2, %s33
      %36 = vsyncadd [#allocation6], 0
      %s37 = smul.addr %s34, 8
      %s38 = scalar_lea.hbm %s1, %s37
      %s39 = sshll.u32 %s38, 4
      %s40 = int_to_ptr.hbm [resolvable:$true] %s39
      %s41 = sshll.u32 [#allocation5], 4
      %s42 = int_to_ptr.vmem [resolvable:$true] %s41
      %47 = dma.hbm_to_vmem [thread:$0]  %s40, 256, %s42, [#allocation6], 128, 128, 8
    $region9: #{tpu_custom_call.1} parent=1 // pred_fallthru
      _
    // Predicated region
    $region10: #{tpu_custom_call.1} parent=1 // pred_check
      _
    $region11: #{tpu_custom_call.1} parent=1 // pred_check_branch
      %49 = sbr.rel (0) target = $region13
    $region12: #{tpu_custom_call.1} parent=1 // pred_region
      %51 = dma.done [#allocation3], 256
    $region13: #{tpu_custom_call.1} parent=1 // pred_fallthru
      _
    // Predicated region
    $region14: #{tpu_custom_call.1} parent=1 // pred_check
      _
    $region15: #{tpu_custom_call.1} parent=1 // pred_check_branch
      %53 = sbr.rel (0) target = $region17
    $region16: #{tpu_custom_call.1} parent=1 // pred_region
      %55 = dma.done [#allocation6], 256
    $region17: #{tpu_custom_call.1} parent=1 // pred_fallthru
      _
    %s56 = sadd.s32 0, 0
    %p57 = scmp.lt.s32.totalorder %s56, 0
    %s58 = scalar_select %p57, %s56, 0
    %s59 = smul.u32 2, %s58
    %s60 = sadd.s32 0, 0
    %p61 = scmp.lt.s32.totalorder %s60, 0
    %s62 = scalar_select %p61, %s60, 0
    %s63 = smul.u32 2, %s62
    %p64 = scmp.eq.s32.totalorder 0, 0
    // Predicated region
    $region18: #{tpu_custom_call.1} parent=1 // pred_check
      %p65 = pneg %p64
    $region19: #{tpu_custom_call.1} parent=1 // pred_check_branch
      %67 = sbr.rel (%p65) target = $region21
    $region20: #{tpu_custom_call.1} parent=1 // pred_region
      %68 = vst [vmem:[#allocation7] sm:$0xff] 0.0
    $region21: #{tpu_custom_call.1} parent=1 // pred_fallthru
      _
    %v69 = vld [vmem:[#allocation2] sm:$0xff]
    %v70 = vld [vmem:[#allocation2 + $0x8] sm:$0xff]
    %v71 = vld [vmem:[#allocation5] sm:$0xff]
    %v72 = vld [vmem:[#allocation5 + $0x8] sm:$0xff]
    %v73 = vsub.f32 %v69, %v71
    %v74 = vsub.f32 %v70, %v72
    %v75 = vmul.f32 %v73, %v73
    %v76 = vmul.f32 %v74, %v74
    %v77 = vadd.f32 %v75, 1e-06
    %v78 = vadd.f32 %v76, 1e-06
    %v79 = vrsqrt.pop %v77
    %v80 = vmul.f32 %v79, %v77
    %v81 = vmul.f32 %v80, %v79
    %v82 = vmul.f32 0.5, %v81
    %v83 = vsub.f32 1.5, %v82
    %v84 = vmul.f32 %v79, %v83
    %v85 = vmul.f32 %v77, %v84
    %vm86 = vcmp.eq.f32.partialorder %v77, inf
    %v87 = vsel %vm86, %v77, %v85
    %vm88 = vcmp.eq.f32.partialorder %v77, 0.0
    %v89 = vand.u32 %v77, 2147483648
    %v90 = vsel %vm88, %v89, %v87
    %v91 = vrsqrt.pop %v78
    %v92 = vmul.f32 %v91, %v78
    %v93 = vmul.f32 %v92, %v91
    %v94 = vmul.f32 0.5, %v93
    %v95 = vsub.f32 1.5, %v94
    %v96 = vmul.f32 %v91, %v95
    %v97 = vmul.f32 %v78, %v96
    %vm98 = vcmp.eq.f32.partialorder %v78, inf
    %v99 = vsel %vm98, %v78, %v97
    %vm100 = vcmp.eq.f32.partialorder %v78, 0.0
    %v101 = vand.u32 %v78, 2147483648
    %v102 = vsel %vm100, %v101, %v99
    %s103 = sadd.s32 0, 0
    %s104 = smul.u32 %s103, 16
    %s105 = sadd.s32 %s104, 16
    %p106 = scmp.le.s32.totalorder %s105, 16
    // Predicated region
    $region22: #{tpu_custom_call.1} parent=1 // pred_check
      %p107 = pneg %p106
    $region23: #{tpu_custom_call.1} parent=1 // pred_check_branch
      %109 = sbr.rel (%p107) target = $region25
    $region24: #{tpu_custom_call.1} parent=1 // pred_region
      %v110 = vadd.f32 %v90, %v102
      %v111 = vld [vmem:[#allocation7] sm:$0xff]
      %v112 = vadd.f32 %v111, %v110
      %113 = vst [vmem:[#allocation7] sm:$0xff] %v112
    $region25: #{tpu_custom_call.1} parent=1 // pred_fallthru
      _
    %p114 = scmp.gt.s32.totalorder %s105, 16
    // Predicated region
    $region26: #{tpu_custom_call.1} parent=1 // pred_check
      %p115 = pneg %p114
    $region27: #{tpu_custom_call.1} parent=1 // pred_check_branch
      %117 = sbr.rel (%p115) target = $region29
    $region28: #{tpu_custom_call.1} parent=1 // pred_region
      %v118 = vlaneseq
      %v119 = vshrl.u32 %v118, 7
      %v120 = vadd.s32 %v119, 8
      %v121 = vstv %s104
      %v122 = vadd.s32 %v119, %v121
      %v123 = vadd.s32 %v120, %v121
      %vm124 = vcmp.lt.s32.totalorder %v122, 16
      %vm125 = vcmp.lt.s32.totalorder %v123, 16
      %v126 = vsel %vm124, %v90, 0.0
      %v127 = vsel %vm125, %v102, 0.0
      %v128 = vadd.f32 %v126, %v127
      %v129 = vld [vmem:[#allocation7] sm:$0xff]
      %v130 = vadd.f32 %v129, %v128
      %131 = vst [vmem:[#allocation7] sm:$0xff] %v130
    $region29: #{tpu_custom_call.1} parent=1 // pred_fallthru
      _
    // Predicated region
    $region30: #{tpu_custom_call.1} parent=1 // pred_check
      _
    $region31: #{tpu_custom_call.1} parent=1 // pred_check_branch
      %133 = sbr.rel (0) target = $region33
    $region32: #{tpu_custom_call.1} parent=1 // pred_region
      %135 = vsyncadd [#allocation4], 0
      %s137 = sshll.u32 [#allocation7], 4
      %s138 = int_to_ptr.vmem [resolvable:$true] %s137
      %s139 = sshll.u32 %s2, 4
      %s140 = int_to_ptr.hbm [resolvable:$true] %s139
      %142 = dma.vmem_to_hbm [thread:$0]  %s138, 128, %s140, [#allocation4]
    $region33: #{tpu_custom_call.1} parent=1 // pred_fallthru
      _
    // Predicated region
    $region34: #{tpu_custom_call.1} parent=1 // pred_check
      _
    $region35: #{tpu_custom_call.1} parent=1 // pred_check_branch
      %144 = sbr.rel (0) target = $region37
    $region36: #{tpu_custom_call.1} parent=1 // pred_region
      %146 = dma.done [#allocation4], 128
    $region37: #{tpu_custom_call.1} parent=1 // pred_fallthru
      _
    %147 = vsyncpa [#allocation3], 1
    %148 = vsyncpa [#allocation6], 1
    %149 = vsyncpa [#allocation4], 1

</llo_original>
